<compile_context>
chip_gen: v6e
topology: v6e:2x2x1
jax: 0.10.0
libtpu: 0.0.40
codegen_flags: <defaults>
</compile_context>

<pallas_src>
import functools

import jax
import jax.numpy as jnp
from jax.experimental import pallas as pl
from jax.experimental.pallas import tpu as pltpu


def _round_up(x, m):
    return (x + m - 1) // m * m


def _vq_kernel(z_ref, codes_ref, c2_ref, zq_ref, loss_ref, idx_ref,
               min_sc, idx_sc, zq_sc, *, beta, tile_k, score_dtype):
    """One (N-tile, K-tile) grid step of the online-argmin VQ forward."""
    k = pl.program_id(1)
    nk = pl.num_programs(1)

    z = z_ref[...]                                    # (TN, D)  f32
    codes = codes_ref[...]                            # (TK, D)  f32
    c2 = c2_ref[...]                                  # (1, TK)  f32  (= ||c_k||^2)

    tn = z.shape[0]
    tk = codes.shape[0]

    # argmin_k ||z - c_k||^2 == argmin_k (||c_k||^2 - 2 z.c_k)
    # Contraction on the last dims of both operands (flash-attention-style
    # q.k^T) -> no codebook transpose; bf16 operands, f32 accumulation.
    zc = jax.lax.dot_general(
        z.astype(score_dtype), codes.astype(score_dtype),
        dimension_numbers=(((1,), (1,)), ((), ())),
        preferred_element_type=jnp.float32)           # (TN, TK)  MXU
    scores = c2 - 2.0 * zc

    local_min = jnp.min(scores, axis=1, keepdims=True)              # (TN, 1)
    local_arg = jnp.argmin(scores, axis=1).astype(jnp.int32)        # (TN,)
    local_idx = local_arg[:, None] + k * tile_k                     # global index

    # Exact gather of this tile's best code via one-hot matmul (f32, MXU).
    lanes = jax.lax.broadcasted_iota(jnp.int32, (tn, tk), 1)
    onehot = (lanes == local_arg[:, None]).astype(jnp.float32)      # (TN, TK)
    local_zq = jnp.dot(onehot, codes, preferred_element_type=jnp.float32)

    @pl.when(k == 0)
    def _():
        min_sc[...] = local_min
        idx_sc[...] = local_idx
        zq_sc[...] = local_zq

    @pl.when(k > 0)
    def _():
        better = local_min < min_sc[...]     # strict '<' keeps the first minimum
        min_sc[...] = jnp.where(better, local_min, min_sc[...])
        idx_sc[...] = jnp.where(better, local_idx, idx_sc[...])
        zq_sc[...] = jnp.where(better, local_zq, zq_sc[...])

    @pl.when(k == nk - 1)
    def _():
        z_q = zq_sc[...]
        diff = z_q - z
        # mean((zq-z)^2 + beta*(z-zq)^2, axis=1) == (1+beta)*mean(diff^2)
        loss = (1.0 + beta) * jnp.mean(diff * diff, axis=1)          # (TN,)
        zq_ref[...] = z_q.astype(zq_ref.dtype)   # forward value of the STE output
        loss_ref[...] = loss[None, :]                                # (1, TN)
        idx_ref[...] = idx_sc[...][:, 0][None, :]                    # (1, TN)


def vq_forward(z, codes, commitment_beta=0.25, *, tile_n=None, tile_k=None,
               score_dtype=jnp.bfloat16):
    """z: (N, D) f32, codes: (K, D) f32 -> (z_q (N, D), loss (N,), indices (N,) i32)."""
    N, D = z.shape
    K, _ = codes.shape

    # Per-TensorCore VMEM capacity (v5e/v6e: 128 MiB, v7x: 64 MiB); conservative
    # fallback if the query is unavailable.
    try:
        vmem_cap = int(getattr(pltpu.get_tpu_info(), "vmem_capacity_bytes", 0)) \
            or 64 * 1024 * 1024
    except Exception:
        vmem_cap = 64 * 1024 * 1024
    fit_budget = (vmem_cap * 3) // 4     # leave headroom below the ceiling

    # --- K tiling: keep small codebooks resident, stream large ones. ---
    if tile_k is None:
        TK = K if K <= 1024 else 512
    else:
        TK = int(tile_k)
    if TK >= K:
        TK, K_pad = K, K                 # single codebook tile, no padding
    else:
        TK = _round_up(TK, 128)          # (1, TK) c2 block -> lane constraint
        K_pad = _round_up(K, TK)
    n_k = K_pad // TK

    def vmem_est(tn, tk):
        dbl = 2 * tn * D * 4                           # z tile (double-buffered)
        dbl += 2 * (tk * D * 4 + tk * 4)               # codes + ||c||^2 (streamed)
        dbl += 2 * (tn * D * 4 + 2 * tn * 4)           # z_q / loss / idx out buffers
        scratch = tn * D * 4 + 2 * tn * 128 * 4        # zq acc + (min, idx), lane-padded
        interm = 4 * tn * tk * 4 + (tn + tk) * D * 2   # score-class temps + bf16 casts
        return dbl + scratch + interm

    # --- N tiling: biggest tile fitting the budget; >= 2 tiles when N >= 256 so
    # the "parallel" axis shards across TensorCores (v7x megacore). ---
    if tile_n is None:
        if N < 256:
            TN = _round_up(N, 8)
        else:
            tn_cap = _round_up(-(-N // 2), 128)        # keep at least 2 N tiles
            TN = 128
            for cand in (1024, 512, 256, 128):
                if cand <= tn_cap and vmem_est(cand, TK) <= fit_budget:
                    TN = cand
                    break
    else:
        TN = int(tile_n)
        TN = _round_up(TN, 128) if TN < N else _round_up(N, 8)
    N_pad = _round_up(N, TN)
    n_n = N_pad // TN

    # --- pad inputs; padded code rows get a huge ||c||^2 so they never win. ---
    z_p = z if N_pad == N else jnp.pad(z, ((0, N_pad - N), (0, 0)))
    c2 = jnp.sum(codes * codes, axis=1)[None, :]                     # (1, K)
    codes_p = codes
    if K_pad != K:
        codes_p = jnp.pad(codes, ((0, K_pad - K), (0, 0)))
        c2 = jnp.pad(c2, ((0, 0), (0, K_pad - K)), constant_values=1e30)

    kernel = functools.partial(_vq_kernel, beta=float(commitment_beta),
                               tile_k=TK, score_dtype=score_dtype)

    flops = 4 * N_pad * K_pad * D                      # score matmul + one-hot gather
    bytes_accessed = 4 * (2 * N_pad * D                # z in + z_q out
                          + n_n * K_pad * (D + 1)      # codebook streamed per N tile
                          + 2 * N_pad)                 # loss + idx
    vmem_limit = int(min(vmem_cap, max(vmem_est(TN, TK) + (4 << 20), 32 << 20)))

    zq, loss, idx = pl.pallas_call(
        kernel,
        out_shape=(
            jax.ShapeDtypeStruct((N_pad, D), jnp.float32),
            jax.ShapeDtypeStruct((1, N_pad), jnp.float32),
            jax.ShapeDtypeStruct((1, N_pad), jnp.int32),
        ),
        grid_spec=pltpu.PrefetchScalarGridSpec(
            num_scalar_prefetch=0,
            grid=(n_n, n_k),                           # K (reduction) is innermost
            in_specs=[
                pl.BlockSpec((TN, D), lambda i, k: (i, 0)),   # z tile (held across k)
                pl.BlockSpec((TK, D), lambda i, k: (k, 0)),   # codebook tile (streamed)
                pl.BlockSpec((1, TK), lambda i, k: (0, k)),   # ||codes||^2 tile
            ],
            out_specs=[
                pl.BlockSpec((TN, D), lambda i, k: (i, 0)),   # z_q tile
                pl.BlockSpec((1, TN), lambda i, k: (0, i)),   # loss (lane-dense)
                pl.BlockSpec((1, TN), lambda i, k: (0, i)),   # indices (lane-dense)
            ],
            scratch_shapes=[
                pltpu.VMEM((TN, 1), jnp.float32),      # running min distance
                pltpu.VMEM((TN, 1), jnp.int32),        # running argmin (global idx)
                pltpu.VMEM((TN, D), jnp.float32),      # running best code (z_q acc)
            ],
        ),
        compiler_params=pltpu.CompilerParams(
            dimension_semantics=("parallel", "arbitrary"),
            vmem_limit_bytes=vmem_limit,
        ),
        cost_estimate=pl.CostEstimate(
            flops=int(flops), transcendentals=0,
            bytes_accessed=int(bytes_accessed)),
    )(z_p, codes_p, c2)

    return zq[:N], loss[0, :N], idx[0, :N]


def vq_reference(z, codes, beta=0.25):
    """Exact PyTorch-module forward (f32 throughout, incl. the ||z||^2 term)."""
    dists = (jnp.sum(z * z, axis=1, keepdims=True)
             - 2.0 * z @ codes.T
             + jnp.sum(codes * codes, axis=1))
    idx = jnp.argmin(dists, axis=1).astype(jnp.int32)
    z_q = codes[idx]
    loss = jnp.mean((z_q - z) ** 2 + beta * (z - z_q) ** 2, axis=1)
    return z_q, loss, idx


def vq_reference_matched(z, codes, beta=0.25, score_dtype=jnp.bfloat16):
    """Reference whose score matmul matches the kernel's (bf16 ops, f32 acc)."""
    zc = jax.lax.dot_general(z.astype(score_dtype), codes.astype(score_dtype),
                             dimension_numbers=(((1,), (1,)), ((), ())),
                             preferred_element_type=jnp.float32)
    scores = jnp.sum(codes * codes, axis=1)[None, :] - 2.0 * zc
    idx = jnp.argmin(scores, axis=1).astype(jnp.int32)
    z_q = codes[idx]
    loss = jnp.mean((z_q - z) ** 2 + beta * (z - z_q) ** 2, axis=1)
    return z_q, loss, idx


if __name__ == "__main__":
    key = jax.random.PRNGKey(0)
    k_codes, k_z = jax.random.split(key)

    # Toy shapes consistent with the module: codebook (K=128, D=32), N=64 latents.
    codebook_size, latent_dim, num_vectors = 128, 32, 64
    codes = jax.random.normal(k_codes, (codebook_size, latent_dim), dtype=jnp.float32)
    z = jax.random.normal(k_z, (num_vectors, latent_dim), dtype=jnp.float32)

    # 1) exact-semantics check: f32 scores vs the PyTorch-formula reference.
    zq32, loss32, idx32 = vq_forward(z, codes, 0.25, score_dtype=jnp.float32)
    jax.block_until_ready((zq32, loss32, idx32))
    zq_r, loss_r, idx_r = vq_reference(z, codes, 0.25)
    assert jnp.array_equal(idx32, idx_r), "indices mismatch (f32 path)"
    assert jnp.allclose(zq32, zq_r, atol=1e-5), "z_q mismatch (f32 path)"
    assert jnp.allclose(loss32, loss_r, atol=1e-5), "loss mismatch (f32 path)"

    # 2) default bf16-score path vs a precision-matched reference.
    zqb, lossb, idxb = vq_forward(z, codes, 0.25)
    jax.block_until_ready((zqb, lossb, idxb))
    zq_m, loss_m, idx_m = vq_reference_matched(z, codes, 0.25)
    assert jnp.array_equal(idxb, idx_m), "indices mismatch (bf16 path)"
    assert jnp.allclose(zqb, zq_m, atol=1e-5), "z_q mismatch (bf16 path)"
    assert jnp.allclose(lossb, loss_m, atol=1e-5), "loss mismatch (bf16 path)"

    # 3) exercise the tiled path: 2 N tiles x 2 K tiles (online argmin carry).
    k_codes2, k_z2 = jax.random.split(jax.random.PRNGKey(1))
    codes2 = jax.random.normal(k_codes2, (256, 32), dtype=jnp.float32)
    z2 = jax.random.normal(k_z2, (256, 32), dtype=jnp.float32)
    zqt, losst, idxt = vq_forward(z2, codes2, 0.25, tile_n=128, tile_k=128)
    jax.block_until_ready((zqt, losst, idxt))
    zq_m2, loss_m2, idx_m2 = vq_reference_matched(z2, codes2, 0.25)
    assert jnp.array_equal(idxt, idx_m2), "indices mismatch (tiled path)"
    assert jnp.allclose(zqt, zq_m2, atol=1e-5), "z_q mismatch (tiled path)"
    assert jnp.allclose(losst, loss_m2, atol=1e-5), "loss mismatch (tiled path)"

    print("KERNEL_OK")
</pallas_src>

<mosaic_0001>
module attributes {stable_mosaic.version = 11 : i64} {
  func.func @_vq_kernel(%arg0: i32, %arg1: i32, %arg2: memref<64x32xf32, #tpu.memory_space<vmem>>, %arg3: memref<128x32xf32, #tpu.memory_space<vmem>>, %arg4: memref<1x128xf32, #tpu.memory_space<vmem>>, %arg5: memref<64x32xf32, #tpu.memory_space<vmem>>, %arg6: memref<1x64xf32, #tpu.memory_space<vmem>>, %arg7: memref<1x64xi32, #tpu.memory_space<vmem>>, %arg8: memref<64x1xf32, #tpu.memory_space<vmem>>, %arg9: memref<64x1xi32, #tpu.memory_space<vmem>>, %arg10: memref<64x32xf32, #tpu.memory_space<vmem>>) attributes {dimension_semantics = [#tpu.dimension_semantics<parallel>, #tpu.dimension_semantics<arbitrary>], iteration_bounds = array<i64: 1, 1>, scalar_prefetch = 0 : i64, scratch_operands = 3 : i64, tpu.core_type = #tpu.core_type<tc>, window_params = [{transform_indices = @transform_0, window_bounds = array<i64: 64, 32>}, {transform_indices = @transform_1, window_bounds = array<i64: 128, 32>}, {transform_indices = @transform_2, window_bounds = array<i64: 1, 128>}, {transform_indices = @transform_3, window_bounds = array<i64: 64, 32>}, {transform_indices = @transform_4, window_bounds = array<i64: 1, 64>}, {transform_indices = @transform_5, window_bounds = array<i64: 1, 64>}]} {
    %c0 = arith.constant 0 : index
    %c0_0 = arith.constant 0 : index
    %0 = vector.load %arg2[%c0, %c0_0] : memref<64x32xf32, #tpu.memory_space<vmem>>, vector<64x32xf32>
    %c0_1 = arith.constant 0 : index
    %c0_2 = arith.constant 0 : index
    %1 = vector.load %arg3[%c0_1, %c0_2] : memref<128x32xf32, #tpu.memory_space<vmem>>, vector<128x32xf32>
    %c0_3 = arith.constant 0 : index
    %c0_4 = arith.constant 0 : index
    %2 = vector.load %arg4[%c0_3, %c0_4] : memref<1x128xf32, #tpu.memory_space<vmem>>, vector<1x128xf32>
    %cst = arith.constant dense<0.000000e+00> : vector<64x128xf32>
    %3 = tpu.matmul %0, %1, %cst {dimension_numbers = #tpu.dot_dimension_numbers<[1], [1], [0], [0], [0, 0, 1, 0], [], []>} : vector<64x32xf32>, vector<128x32xf32>, vector<64x128xf32> -> vector<64x128xf32>
    %cst_5 = arith.constant 2.000000e+00 : f32
    %4 = vector.broadcast %cst_5 : f32 to vector<64x128xf32>
    %5 = arith.mulf %4, %3 : vector<64x128xf32>
    %6 = vector.broadcast %2 : vector<1x128xf32> to vector<64x128xf32>
    %7 = arith.subf %6, %5 : vector<64x128xf32>
    %cst_6 = arith.constant dense<0x7F800000> : vector<64xf32>
    %8 = vector.multi_reduction <minimumf>, %7, %cst_6 [1] : vector<64x128xf32> to vector<64xf32>
    %9 = vector.shape_cast %8 : vector<64xf32> to vector<64x1xf32>
    %10 = tpu.reduce_index %7 {axis = 1 : i32, kind = #tpu.reduction_kind<arg_min>} : vector<64x128xf32> -> vector<64xi32>
    %11 = vector.shape_cast %10 : vector<64xi32> to vector<64x1xi32>
    %c128_i32 = arith.constant 128 : i32
    %12 = arith.muli %arg1, %c128_i32 : i32
    %13 = vector.broadcast %12 : i32 to vector<64x1xi32>
    %14 = arith.addi %11, %13 : vector<64x1xi32>
    %15 = tpu.iota {dimensions = array<i32: 1>} : vector<64x128xi32>
    %16 = vector.shape_cast %10 : vector<64xi32> to vector<64x1xi32>
    %17 = vector.broadcast %16 : vector<64x1xi32> to vector<64x128xi32>
    %18 = arith.cmpi eq, %15, %17 : vector<64x128xi32>
    %19 = arith.extui %18 : vector<64x128xi1> to vector<64x128xi32>
    %20 = arith.sitofp %19 : vector<64x128xi32> to vector<64x128xf32>
    %cst_7 = arith.constant dense<0.000000e+00> : vector<64x32xf32>
    %21 = tpu.matmul %20, %1, %cst_7 {dimension_numbers = #tpu.dot_dimension_numbers<[1], [0], [0], [1], [0, 0, 1, 1], [], []>} : vector<64x128xf32>, vector<128x32xf32>, vector<64x32xf32> -> vector<64x32xf32>
    %c0_i32 = arith.constant 0 : i32
    %22 = arith.cmpi eq, %arg1, %c0_i32 : i32
    %23 = arith.extui %22 : i1 to i32
    %c0_i32_8 = arith.constant 0 : i32
    %24 = arith.cmpi ne, %23, %c0_i32_8 : i32
    scf.if %24 {
      %c0_13 = arith.constant 0 : index
      %c0_14 = arith.constant 0 : index
      %31 = vector.load %arg8[%c0_13, %c0_14] : memref<64x1xf32, #tpu.memory_space<vmem>>, vector<64x1xf32>
      tpu.vector_store %arg8[%c0_13, %c0_14], %9 {strides = array<i32>} : memref<64x1xf32, #tpu.memory_space<vmem>>, vector<64x1xf32>,
      %c0_15 = arith.constant 0 : index
      %c0_16 = arith.constant 0 : index
      %32 = vector.load %arg9[%c0_15, %c0_16] : memref<64x1xi32, #tpu.memory_space<vmem>>, vector<64x1xi32>
      tpu.vector_store %arg9[%c0_15, %c0_16], %14 {strides = array<i32>} : memref<64x1xi32, #tpu.memory_space<vmem>>, vector<64x1xi32>,
      %c0_17 = arith.constant 0 : index
      %c0_18 = arith.constant 0 : index
      %33 = vector.load %arg10[%c0_17, %c0_18] : memref<64x32xf32, #tpu.memory_space<vmem>>, vector<64x32xf32>
      tpu.vector_store %arg10[%c0_17, %c0_18], %21 {strides = array<i32>} : memref<64x32xf32, #tpu.memory_space<vmem>>, vector<64x32xf32>,
    } else {
    }
    %c0_i32_9 = arith.constant 0 : i32
    %25 = arith.cmpi sgt, %arg1, %c0_i32_9 : i32
    %26 = arith.extui %25 : i1 to i32
    %c0_i32_10 = arith.constant 0 : i32
    %27 = arith.cmpi ne, %26, %c0_i32_10 : i32
    scf.if %27 {
      %c0_13 = arith.constant 0 : index
      %c0_14 = arith.constant 0 : index
      %31 = vector.load %arg8[%c0_13, %c0_14] : memref<64x1xf32, #tpu.memory_space<vmem>>, vector<64x1xf32>
      %32 = arith.cmpf olt, %9, %31 : vector<64x1xf32>
      %c0_15 = arith.constant 0 : index
      %c0_16 = arith.constant 0 : index
      %33 = vector.load %arg8[%c0_15, %c0_16] : memref<64x1xf32, #tpu.memory_space<vmem>>, vector<64x1xf32>
      %34 = arith.select %32, %9, %33 : vector<64x1xi1>, vector<64x1xf32>
      %c0_17 = arith.constant 0 : index
      %c0_18 = arith.constant 0 : index
      %35 = vector.load %arg8[%c0_17, %c0_18] : memref<64x1xf32, #tpu.memory_space<vmem>>, vector<64x1xf32>
      tpu.vector_store %arg8[%c0_17, %c0_18], %34 {strides = array<i32>} : memref<64x1xf32, #tpu.memory_space<vmem>>, vector<64x1xf32>,
      %c0_19 = arith.constant 0 : index
      %c0_20 = arith.constant 0 : index
      %36 = vector.load %arg9[%c0_19, %c0_20] : memref<64x1xi32, #tpu.memory_space<vmem>>, vector<64x1xi32>
      %37 = arith.select %32, %14, %36 : vector<64x1xi1>, vector<64x1xi32>
      %c0_21 = arith.constant 0 : index
      %c0_22 = arith.constant 0 : index
      %38 = vector.load %arg9[%c0_21, %c0_22] : memref<64x1xi32, #tpu.memory_space<vmem>>, vector<64x1xi32>
      tpu.vector_store %arg9[%c0_21, %c0_22], %37 {strides = array<i32>} : memref<64x1xi32, #tpu.memory_space<vmem>>, vector<64x1xi32>,
      %c0_23 = arith.constant 0 : index
      %c0_24 = arith.constant 0 : index
      %39 = vector.load %arg10[%c0_23, %c0_24] : memref<64x32xf32, #tpu.memory_space<vmem>>, vector<64x32xf32>
      %40 = vector.shape_cast %32 : vector<64x1xi1> to vector<64x1xi1>
      %41 = vector.broadcast %40 : vector<64x1xi1> to vector<64x32xi1>
      %42 = arith.select %41, %21, %39 : vector<64x32xi1>, vector<64x32xf32>
      %c0_25 = arith.constant 0 : index
      %c0_26 = arith.constant 0 : index
      %43 = vector.load %arg10[%c0_25, %c0_26] : memref<64x32xf32, #tpu.memory_space<vmem>>, vector<64x32xf32>
      tpu.vector_store %arg10[%c0_25, %c0_26], %42 {strides = array<i32>} : memref<64x32xf32, #tpu.memory_space<vmem>>, vector<64x32xf32>,
    } else {
    }
    %c0_i32_11 = arith.constant 0 : i32
    %28 = arith.cmpi eq, %arg1, %c0_i32_11 : i32
    %29 = arith.extui %28 : i1 to i32
    %c0_i32_12 = arith.constant 0 : i32
    %30 = arith.cmpi ne, %29, %c0_i32_12 : i32
    scf.if %30 {
      %c0_13 = arith.constant 0 : index
      %c0_14 = arith.constant 0 : index
      %31 = vector.load %arg10[%c0_13, %c0_14] : memref<64x32xf32, #tpu.memory_space<vmem>>, vector<64x32xf32>
      %32 = arith.subf %31, %0 : vector<64x32xf32>
      %33 = arith.mulf %32, %32 : vector<64x32xf32>
      %cst_15 = arith.constant dense<0.000000e+00> : vector<64xf32>
      %34 = vector.multi_reduction <add>, %33, %cst_15 [1] : vector<64x32xf32> to vector<64xf32>
      %cst_16 = arith.constant 3.200000e+01 : f32
      %35 = vector.broadcast %cst_16 : f32 to vector<64xf32>
      %36 = arith.divf %34, %35 : vector<64xf32>
      %cst_17 = arith.constant 1.250000e+00 : f32
      %37 = vector.broadcast %cst_17 : f32 to vector<64xf32>
      %38 = arith.mulf %37, %36 : vector<64xf32>
      %c0_18 = arith.constant 0 : index
      %c0_19 = arith.constant 0 : index
      %39 = vector.load %arg5[%c0_18, %c0_19] : memref<64x32xf32, #tpu.memory_space<vmem>>, vector<64x32xf32>
      tpu.vector_store %arg5[%c0_18, %c0_19], %31 {strides = array<i32>} : memref<64x32xf32, #tpu.memory_space<vmem>>, vector<64x32xf32>,
      %40 = vector.shape_cast %38 : vector<64xf32> to vector<1x64xf32>
      %c0_20 = arith.constant 0 : index
      %c0_21 = arith.constant 0 : index
      %41 = vector.load %arg6[%c0_20, %c0_21] : memref<1x64xf32, #tpu.memory_space<vmem>>, vector<1x64xf32>
      tpu.vector_store %arg6[%c0_20, %c0_21], %40 {strides = array<i32>} : memref<1x64xf32, #tpu.memory_space<vmem>>, vector<1x64xf32>,
      %c0_22 = arith.constant 0 : index
      %c0_23 = arith.constant 0 : index
      %42 = vector.load %arg9[%c0_22, %c0_23] : memref<64x1xi32, #tpu.memory_space<vmem>>, vector<64x1xi32>
      %43 = vector.shape_cast %42 : vector<64x1xi32> to vector<64xi32>
      %44 = vector.shape_cast %43 : vector<64xi32> to vector<1x64xi32>
      %c0_24 = arith.constant 0 : index
      %c0_25 = arith.constant 0 : index
      %45 = vector.load %arg7[%c0_24, %c0_25] : memref<1x64xi32, #tpu.memory_space<vmem>>, vector<1x64xi32>
      tpu.vector_store %arg7[%c0_24, %c0_25], %44 {strides = array<i32>} : memref<1x64xi32, #tpu.memory_space<vmem>>, vector<1x64xi32>,
    } else {
    }
    return
  }
  func.func @transform_0(%arg0: i32, %arg1: i32) -> (i32, i32) {
    %c0_i32 = arith.constant 0 : i32
    %c0_i32_0 = arith.constant 0 : i32
    return %arg0, %c0_i32 : i32, i32
  }
  func.func @transform_1(%arg0: i32, %arg1: i32) -> (i32, i32) {
    %c0_i32 = arith.constant 0 : i32
    %c0_i32_0 = arith.constant 0 : i32
    return %arg1, %c0_i32 : i32, i32
  }
  func.func @transform_2(%arg0: i32, %arg1: i32) -> (i32, i32) {
    %c0_i32 = arith.constant 0 : i32
    %c0_i32_0 = arith.constant 0 : i32
    return %c0_i32, %arg1 : i32, i32
  }
  func.func @transform_3(%arg0: i32, %arg1: i32) -> (i32, i32) {
    %c0_i32 = arith.constant 0 : i32
    %c0_i32_0 = arith.constant 0 : i32
    return %arg0, %c0_i32 : i32, i32
  }
  func.func @transform_4(%arg0: i32, %arg1: i32) -> (i32, i32) {
    %c0_i32 = arith.constant 0 : i32
    %c0_i32_0 = arith.constant 0 : i32
    return %c0_i32, %arg0 : i32, i32
  }
  func.func @transform_5(%arg0: i32, %arg1: i32) -> (i32, i32) {
    %c0_i32 = arith.constant 0 : i32
    %c0_i32_0 = arith.constant 0 : i32
    return %c0_i32, %arg0 : i32, i32
  }
}

</mosaic_0001>

<llo_original>
// kernel: tpu_custom_call.1
$region0: #{tpu_custom_call.1}
  #allocation0 [shape = 'u32[]', space=smem, size = 0x4, offset = 0x4, fixed_abs, tag = 'smem constant byte address 0x4 - core index']
  #allocation1 [shape = 'u32[144,128]{1,0:T(1,128)}', space=vmem, size = 0x12000, scoped, tag = 'internal scratch']
  #allocation2 [shape = 'f32[64,1]{1,0:T(8,128)}', space=vmem, size = 0x8000, scoped, tag = 'scratch operand']
  #allocation3 [shape = 's32[64,1]{1,0:T(8,128)}', space=vmem, size = 0x8000, scoped, tag = 'scratch operand']
  #allocation4 [shape = 'f32[64,32]{1,0:T(8,128)}', space=vmem, size = 0x8000, scoped, tag = 'scratch operand']
  %s0 = inlined_call_operand.vmem [shape: f32[64,32], index: 0, kind: input, shape index: {}]
  %s1 = inlined_call_operand.vmem [shape: f32[128,32], index: 1, kind: input, shape index: {}]
  %s2 = inlined_call_operand.vmem [shape: f32[1,128], index: 2, kind: input, shape index: {}]
  %s3 = inlined_call_operand.vmem [shape: f32[64,32], index: 3, kind: output, shape index: {0}]
  %s4 = inlined_call_operand.hbm [shape: f32[1,64], index: 4, kind: output, shape index: {1}]
  %s5 = inlined_call_operand.hbm [shape: s32[1,64], index: 5, kind: output, shape index: {2}]
  %6 = xla_tuple %s3, %s4, %s5
  %s7 = sld [smem:[#allocation0]]
  $region50: #{tpu_custom_call.1} parent=0
    _
  %s9 = ssub.s32 1, %s7
  %s10 = scalar_select 0, %s9, %s7
  $region1: #{tpu_custom_call.1} parent=0
    #allocation5 [shape = 'u8[512]{0}', space=vmem, size = 0x400, scoped, tag = 'output window, operand 1, single buffered']
    #allocation6 [shape = 's32[1]{0}', space=sflag, size = 0x4, scoped, tag = 'scoped memory for tpu_custom_call.1']
    #allocation7 [shape = 'u8[512]{0}', space=vmem, size = 0x400, scoped, tag = 'output window, operand 2, single buffered']
    #allocation8 [shape = 's32[1]{0}', space=sflag, size = 0x4, scoped, tag = 'scoped memory for tpu_custom_call.1']
    %11 = vsyncpa [#allocation6], 0
    %12 = vsyncpa [#allocation8], 0
    // Predicated region
    $region2: #{tpu_custom_call.1} parent=1 // pred_check
      _
    $region3: #{tpu_custom_call.1} parent=1 // pred_check_branch
      %14 = sbr.rel (0) target = $region5
    $region4: #{tpu_custom_call.1} parent=1 // pred_region
      _
    $region5: #{tpu_custom_call.1} parent=1 // pred_fallthru
      _
    // Predicated region
    $region6: #{tpu_custom_call.1} parent=1 // pred_check
      _
    $region7: #{tpu_custom_call.1} parent=1 // pred_check_branch
      %16 = sbr.rel (0) target = $region9
    $region8: #{tpu_custom_call.1} parent=1 // pred_region
      _
    $region9: #{tpu_custom_call.1} parent=1 // pred_fallthru
      _
    // Predicated region
    $region10: #{tpu_custom_call.1} parent=1 // pred_check
      _
    $region11: #{tpu_custom_call.1} parent=1 // pred_check_branch
      %18 = sbr.rel (0) target = $region13
    $region12: #{tpu_custom_call.1} parent=1 // pred_region
      _
    $region13: #{tpu_custom_call.1} parent=1 // pred_fallthru
      _
    %v19 = vld [vmem:[%s0] sm:$0xff]
    %v20 = vld [vmem:[%s0 + $0x8] sm:$0xff]
    %v21 = vld [vmem:[%s0 + $0x10] sm:$0xff]
    %v22 = vld [vmem:[%s0 + $0x18] sm:$0xff]
    %v23 = vld [vmem:[%s0 + $0x20] sm:$0xff]
    %v24 = vld [vmem:[%s0 + $0x28] sm:$0xff]
    %v25 = vld [vmem:[%s0 + $0x30] sm:$0xff]
    %v26 = vld [vmem:[%s0 + $0x38] sm:$0xff]
    %v27 = vld [vmem:[%s1] sm:$0xff]
    %v28 = vld [vmem:[%s1 + $0x8] sm:$0xff]
    %v29 = vld [vmem:[%s1 + $0x10] sm:$0xff]
    %v30 = vld [vmem:[%s1 + $0x18] sm:$0xff]
    %v31 = vld [vmem:[%s1 + $0x20] sm:$0xff]
    %v32 = vld [vmem:[%s1 + $0x28] sm:$0xff]
    %v33 = vld [vmem:[%s1 + $0x30] sm:$0xff]
    %v34 = vld [vmem:[%s1 + $0x38] sm:$0xff]
    %v35 = vld [vmem:[%s1 + $0x40] sm:$0xff]
    %v36 = vld [vmem:[%s1 + $0x48] sm:$0xff]
    %v37 = vld [vmem:[%s1 + $0x50] sm:$0xff]
    %v38 = vld [vmem:[%s1 + $0x58] sm:$0xff]
    %v39 = vld [vmem:[%s1 + $0x60] sm:$0xff]
    %v40 = vld [vmem:[%s1 + $0x68] sm:$0xff]
    %v41 = vld [vmem:[%s1 + $0x70] sm:$0xff]
    %v42 = vld [vmem:[%s1 + $0x78] sm:$0xff]
    %v43 = vld [vmem:[%s2] sm:$0x1]
    %vm44 = vcmask 261120
    %v46 = vsel %vm44, %v19, 0
    %v49 = vsel %vm44, %v20, 0
    %v52 = vsel %vm44, %v21, 0
    %v55 = vsel %vm44, %v22, 0
    %v58 = vsel %vm44, %v23, 0
    %v61 = vsel %vm44, %v24, 0
    %v64 = vsel %vm44, %v25, 0
    %v67 = vsel %vm44, %v26, 0
    %v70 = vsel %vm44, %v27, 0
    %v73 = vsel %vm44, %v28, 0
    %v76 = vsel %vm44, %v29, 0
    %v79 = vsel %vm44, %v30, 0
    %v82 = vsel %vm44, %v31, 0
    %v85 = vsel %vm44, %v32, 0
    %v88 = vsel %vm44, %v33, 0
    %v91 = vsel %vm44, %v34, 0
    %v94 = vsel %vm44, %v35, 0
    %v97 = vsel %vm44, %v36, 0
    %v100 = vsel %vm44, %v37, 0
    %v103 = vsel %vm44, %v38, 0
    %v106 = vsel %vm44, %v39, 0
    %v109 = vsel %vm44, %v40, 0
    %v112 = vsel %vm44, %v41, 0
    %v115 = vsel %vm44, %v42, 0
    %117 = vmatprep.subr.mxu0 0.0
    %118 = vmatpush1.xpose.msra.mxu0 %v115
    %119 = vmatprep.subr.mxu0 0.0
    %120 = vmatpush1.xpose.msra.mxu0 %v112
    %121 = vmatprep.subr.mxu0 0.0
    %122 = vmatpush1.xpose.msra.mxu0 %v109
    %123 = vmatprep.subr.mxu0 0.0
    %124 = vmatpush1.xpose.msra.mxu0 %v106
    %125 = vmatprep.subr.mxu0 0.0
    %126 = vmatpush1.xpose.msra.mxu0 %v103
    %127 = vmatprep.subr.mxu0 0.0
    %128 = vmatpush1.xpose.msra.mxu0 %v100
    %129 = vmatprep.subr.mxu0 0.0
    %130 = vmatpush1.xpose.msra.mxu0 %v97
    %131 = vmatprep.subr.mxu0 0.0
    %132 = vmatpush1.xpose.msra.mxu0 %v94
    %133 = vmatprep.subr.mxu0 0.0
    %134 = vmatpush1.xpose.msra.mxu0 %v91
    %135 = vmatprep.subr.mxu0 0.0
    %136 = vmatpush1.xpose.msra.mxu0 %v88
    %137 = vmatprep.subr.mxu0 0.0
    %138 = vmatpush1.xpose.msra.mxu0 %v85
    %139 = vmatprep.subr.mxu0 0.0
    %140 = vmatpush1.xpose.msra.mxu0 %v82
    %141 = vmatprep.subr.mxu0 0.0
    %142 = vmatpush1.xpose.msra.mxu0 %v79
    %143 = vmatprep.subr.mxu0 0.0
    %144 = vmatpush1.xpose.msra.mxu0 %v76
    %145 = vmatprep.subr.mxu0 0.0
    %146 = vmatpush1.xpose.msra.mxu0 %v73
    %147 = vmatprep.subr.mxu0 0.0
    %148 = vmatpush1.xpose.msra.mxu0 %v70
    %149 = vmatprep.subr.mxu0 0.0
    %150 = vmatpush2.xpose.msra.mxu0 0.0
    %151 = vmatprep.subr.mxu0 0.0
    %152 = vmatpush2.xpose.msra.mxu0 0.0
    %153 = vmatprep.subr.mxu0 0.0
    %154 = vmatpush2.xpose.msra.mxu0 0.0
    %155 = vmatprep.subr.mxu0 0.0
    %156 = vmatpush2.xpose.msra.mxu0 0.0
    %157 = vmatprep.subr.mxu0 0.0
    %158 = vmatpush2.xpose.msra.mxu0 0.0
    %159 = vmatprep.subr.mxu0 0.0
    %160 = vmatpush2.xpose.msra.mxu0 0.0
    %161 = vmatprep.subr.mxu0 0.0
    %162 = vmatpush2.xpose.msra.mxu0 0.0
    %163 = vmatprep.subr.mxu0 0.0
    %164 = vmatpush2.xpose.msra.mxu0 0.0
    %165 = vmatprep.subr.mxu0 0.0
    %166 = vmatpush2.xpose.msra.mxu0 0.0
    %167 = vmatprep.subr.mxu0 0.0
    %168 = vmatpush2.xpose.msra.mxu0 0.0
    %169 = vmatprep.subr.mxu0 0.0
    %170 = vmatpush2.xpose.msra.mxu0 0.0
    %171 = vmatprep.subr.mxu0 0.0
    %172 = vmatpush2.xpose.msra.mxu0 0.0
    %173 = vmatprep.subr.mxu0 0.0
    %174 = vmatpush2.xpose.msra.mxu0 0.0
    %175 = vmatprep.subr.mxu0 0.0
    %176 = vmatpush2.xpose.msra.mxu0 0.0
    %177 = vmatprep.subr.mxu0 0.0
    %178 = vmatpush2.xpose.msra.mxu0 0.0
    %179 = vmatprep.subr.mxu0 0.0
    %180 = vmatpush2.xpose.msra.mxu0 0.0
    %181 = vmatprep.mubr.f32.mxu0 0.0
    %182 = vmatmul.mubr.f32.gmra.mxu0 %v46
    %v183 = vpop.f32.mrf.mxu0
    %v184 = vadd.f32 0.0, %v183
    %v185 = vpop.f32.mrf.mxu0
    %186 = vmatprep.mubr.f32.mxu0 0.0
    %187 = vmatmul.mubr.f32.gmra.mxu0 %v49
    %v188 = vpop.f32.mrf.mxu0
    %v189 = vadd.f32 0.0, %v188
    %v190 = vpop.f32.mrf.mxu0
    %191 = vmatprep.mubr.f32.mxu0 0.0
    %192 = vmatmul.mubr.f32.gmra.mxu0 %v52
    %v193 = vpop.f32.mrf.mxu0
    %v194 = vadd.f32 0.0, %v193
    %v195 = vpop.f32.mrf.mxu0
    %196 = vmatprep.mubr.f32.mxu0 0.0
    %197 = vmatmul.mubr.f32.gmra.mxu0 %v55
    %v198 = vpop.f32.mrf.mxu0
    %v199 = vadd.f32 0.0, %v198
    %v200 = vpop.f32.mrf.mxu0
    %201 = vmatprep.mubr.f32.mxu0 0.0
    %202 = vmatmul.mubr.f32.gmra.mxu0 %v58
    %v203 = vpop.f32.mrf.mxu0
    %v204 = vadd.f32 0.0, %v203
    %v205 = vpop.f32.mrf.mxu0
    %206 = vmatprep.mubr.f32.mxu0 0.0
    %207 = vmatmul.mubr.f32.gmra.mxu0 %v61
    %v208 = vpop.f32.mrf.mxu0
    %v209 = vadd.f32 0.0, %v208
    %v210 = vpop.f32.mrf.mxu0
    %211 = vmatprep.mubr.f32.mxu0 0.0
    %212 = vmatmul.mubr.f32.gmra.mxu0 %v64
    %v213 = vpop.f32.mrf.mxu0
    %v214 = vadd.f32 0.0, %v213
    %v215 = vpop.f32.mrf.mxu0
    %216 = vmatprep.mubr.f32.mxu0 0.0
    %217 = vmatmul.mubr.f32.gmra.mxu0 %v67
    %v218 = vpop.f32.mrf.mxu0
    %v219 = vadd.f32 0.0, %v218
    %v220 = vpop.f32.mrf.mxu0
    %221 = vdwg.mxu0
    %v222 = vmul.f32 %v184, 2.0
    %v223 = vmul.f32 %v189, 2.0
    %v224 = vmul.f32 %v194, 2.0
    %v225 = vmul.f32 %v199, 2.0
    %v226 = vmul.f32 %v204, 2.0
    %v227 = vmul.f32 %v209, 2.0
    %v228 = vmul.f32 %v214, 2.0
    %v229 = vmul.f32 %v219, 2.0
    %v231 = vlaneseq
    %v232 = vshrl.u32 %v231, 7
    %v233 = vsub.s32 0, %v232
    %v234 = vrot.slane %v43, %v233
    %v236 = vsub.f32 %v234, %v222
    %v237 = vsub.f32 %v234, %v223
    %v238 = vsub.f32 %v234, %v224
    %v239 = vsub.f32 %v234, %v225
    %v240 = vsub.f32 %v234, %v226
    %v241 = vsub.f32 %v234, %v227
    %v242 = vsub.f32 %v234, %v228
    %v243 = vsub.f32 %v234, %v229
    %244 = vmin.xlane.f32.xlu0 %v236
    %v245 = vpop.xlane.xlu0 %244
    %246 = vmin.xlane.f32.xlu0 %v237
    %v247 = vpop.xlane.xlu0 %246
    %248 = vmin.xlane.f32.xlu0 %v238
    %v249 = vpop.xlane.xlu0 %248
    %250 = vmin.xlane.f32.xlu0 %v239
    %v251 = vpop.xlane.xlu0 %250
    %252 = vmin.xlane.f32.xlu0 %v240
    %v253 = vpop.xlane.xlu0 %252
    %254 = vmin.xlane.f32.xlu0 %v241
    %v255 = vpop.xlane.xlu0 %254
    %256 = vmin.xlane.f32.xlu0 %v242
    %v257 = vpop.xlane.xlu0 %256
    %258 = vmin.xlane.f32.xlu0 %v243
    %v259 = vpop.xlane.xlu0 %258
    %260 = vmin.index.xlane.f32.xlu0 %v236
    %v261 = vpop.xlane.xlu0 %260
    %262 = vmin.index.xlane.f32.xlu0 %v237
    %v263 = vpop.xlane.xlu0 %262
    %264 = vmin.index.xlane.f32.xlu0 %v238
    %v265 = vpop.xlane.xlu0 %264
    %266 = vmin.index.xlane.f32.xlu0 %v239
    %v267 = vpop.xlane.xlu0 %266
    %268 = vmin.index.xlane.f32.xlu0 %v240
    %v269 = vpop.xlane.xlu0 %268
    %270 = vmin.index.xlane.f32.xlu0 %v241
    %v271 = vpop.xlane.xlu0 %270
    %272 = vmin.index.xlane.f32.xlu0 %v242
    %v273 = vpop.xlane.xlu0 %272
    %274 = vmin.index.xlane.f32.xlu0 %v243
    %v275 = vpop.xlane.xlu0 %274
    %s276 = smul.u32 0, 128
    %v277 = vstv %s276
    %v278 = vadd.s32 %v261, %v277
    %v279 = vadd.s32 %v263, %v277
    %v280 = vadd.s32 %v265, %v277
    %v281 = vadd.s32 %v267, %v277
    %v282 = vadd.s32 %v269, %v277
    %v283 = vadd.s32 %v271, %v277
    %v284 = vadd.s32 %v273, %v277
    %v285 = vadd.s32 %v275, %v277
    %v286 = vlaneseq
    %v287 = vand.u32 %v286, 127
    %vm288 = vcmp.eq.s32.totalorder %v287, %v261
    %vm289 = vcmp.eq.s32.totalorder %v287, %v263
    %vm290 = vcmp.eq.s32.totalorder %v287, %v265
    %vm291 = vcmp.eq.s32.totalorder %v287, %v267
    %vm292 = vcmp.eq.s32.totalorder %v287, %v269
    %vm293 = vcmp.eq.s32.totalorder %v287, %v271
    %vm294 = vcmp.eq.s32.totalorder %v287, %v273
    %vm295 = vcmp.eq.s32.totalorder %v287, %v275
    %v296 = vsel %vm288, 1, 0
    %v297 = vsel %vm289, 1, 0
    %v298 = vsel %vm290, 1, 0
    %v299 = vsel %vm291, 1, 0
    %v300 = vsel %vm292, 1, 0
    %v301 = vsel %vm293, 1, 0
    %v302 = vsel %vm294, 1, 0
    %v303 = vsel %vm295, 1, 0
    %v304 = vcvt.s32.f32 %v296
    %v305 = vcvt.s32.f32 %v297
    %v306 = vcvt.s32.f32 %v298
    %v307 = vcvt.s32.f32 %v299
    %v308 = vcvt.s32.f32 %v300
    %v309 = vcvt.s32.f32 %v301
    %v310 = vcvt.s32.f32 %v302
    %v311 = vcvt.s32.f32 %v303
    %312 = vmatprep.subr.mxu0 0.0
    %313 = vmatpush1.msra.mxu0 %v42
    %314 = vmatprep.subr.mxu0 0.0
    %315 = vmatpush1.msra.mxu0 %v41
    %316 = vmatprep.subr.mxu0 0.0
    %317 = vmatpush1.msra.mxu0 %v40
    %318 = vmatprep.subr.mxu0 0.0
    %319 = vmatpush1.msra.mxu0 %v39
    %320 = vmatprep.subr.mxu0 0.0
    %321 = vmatpush1.msra.mxu0 %v38
    %322 = vmatprep.subr.mxu0 0.0
    %323 = vmatpush1.msra.mxu0 %v37
    %324 = vmatprep.subr.mxu0 0.0
    %325 = vmatpush1.msra.mxu0 %v36
    %326 = vmatprep.subr.mxu0 0.0
    %327 = vmatpush1.msra.mxu0 %v35
    %328 = vmatprep.subr.mxu0 0.0
    %329 = vmatpush1.msra.mxu0 %v34
    %330 = vmatprep.subr.mxu0 0.0
    %331 = vmatpush1.msra.mxu0 %v33
    %332 = vmatprep.subr.mxu0 0.0
    %333 = vmatpush1.msra.mxu0 %v32
    %334 = vmatprep.subr.mxu0 0.0
    %335 = vmatpush1.msra.mxu0 %v31
    %336 = vmatprep.subr.mxu0 0.0
    %337 = vmatpush1.msra.mxu0 %v30
    %338 = vmatprep.subr.mxu0 0.0
    %339 = vmatpush1.msra.mxu0 %v29
    %340 = vmatprep.subr.mxu0 0.0
    %341 = vmatpush1.msra.mxu0 %v28
    %342 = vmatprep.subr.mxu0 0.0
    %343 = vmatpush1.msra.mxu0 %v27
    %344 = vmatprep.subr.mxu0 0.0
    %345 = vmatpush2.msra.mxu0 0.0
    %346 = vmatprep.subr.mxu0 0.0
    %347 = vmatpush2.msra.mxu0 0.0
    %348 = vmatprep.subr.mxu0 0.0
    %349 = vmatpush2.msra.mxu0 0.0
    %350 = vmatprep.subr.mxu0 0.0
    %351 = vmatpush2.msra.mxu0 0.0
    %352 = vmatprep.subr.mxu0 0.0
    %353 = vmatpush2.msra.mxu0 0.0
    %354 = vmatprep.subr.mxu0 0.0
    %355 = vmatpush2.msra.mxu0 0.0
    %356 = vmatprep.subr.mxu0 0.0
    %357 = vmatpush2.msra.mxu0 0.0
    %358 = vmatprep.subr.mxu0 0.0
    %359 = vmatpush2.msra.mxu0 0.0
    %360 = vmatprep.subr.mxu0 0.0
    %361 = vmatpush2.msra.mxu0 0.0
    %362 = vmatprep.subr.mxu0 0.0
    %363 = vmatpush2.msra.mxu0 0.0
    %364 = vmatprep.subr.mxu0 0.0
    %365 = vmatpush2.msra.mxu0 0.0
    %366 = vmatprep.subr.mxu0 0.0
    %367 = vmatpush2.msra.mxu0 0.0
    %368 = vmatprep.subr.mxu0 0.0
    %369 = vmatpush2.msra.mxu0 0.0
    %370 = vmatprep.subr.mxu0 0.0
    %371 = vmatpush2.msra.mxu0 0.0
    %372 = vmatprep.subr.mxu0 0.0
    %373 = vmatpush2.msra.mxu0 0.0
    %374 = vmatprep.subr.mxu0 0.0
    %375 = vmatpush2.msra.mxu0 0.0
    %376 = vmatprep.mubr.f32.mxu0 0.0
    %377 = vmatmul.mubr.f32.gmra.mxu0 %v304
    %v378 = vpop.f32.mrf.mxu0
    %v379 = vadd.f32 0.0, %v378
    %v380 = vpop.f32.mrf.mxu0
    %381 = vmatprep.mubr.f32.mxu0 0.0
    %382 = vmatmul.mubr.f32.gmra.mxu0 %v305
    %v383 = vpop.f32.mrf.mxu0
    %v384 = vadd.f32 0.0, %v383
    %v385 = vpop.f32.mrf.mxu0
    %386 = vmatprep.mubr.f32.mxu0 0.0
    %387 = vmatmul.mubr.f32.gmra.mxu0 %v306
    %v388 = vpop.f32.mrf.mxu0
    %v389 = vadd.f32 0.0, %v388
    %v390 = vpop.f32.mrf.mxu0
    %391 = vmatprep.mubr.f32.mxu0 0.0
    %392 = vmatmul.mubr.f32.gmra.mxu0 %v307
    %v393 = vpop.f32.mrf.mxu0
    %v394 = vadd.f32 0.0, %v393
    %v395 = vpop.f32.mrf.mxu0
    %396 = vmatprep.mubr.f32.mxu0 0.0
    %397 = vmatmul.mubr.f32.gmra.mxu0 %v308
    %v398 = vpop.f32.mrf.mxu0
    %v399 = vadd.f32 0.0, %v398
    %v400 = vpop.f32.mrf.mxu0
    %401 = vmatprep.mubr.f32.mxu0 0.0
    %402 = vmatmul.mubr.f32.gmra.mxu0 %v309
    %v403 = vpop.f32.mrf.mxu0
    %v404 = vadd.f32 0.0, %v403
    %v405 = vpop.f32.mrf.mxu0
    %406 = vmatprep.mubr.f32.mxu0 0.0
    %407 = vmatmul.mubr.f32.gmra.mxu0 %v310
    %v408 = vpop.f32.mrf.mxu0
    %v409 = vadd.f32 0.0, %v408
    %v410 = vpop.f32.mrf.mxu0
    %411 = vmatprep.mubr.f32.mxu0 0.0
    %412 = vmatmul.mubr.f32.gmra.mxu0 %v311
    %v413 = vpop.f32.mrf.mxu0
    %v414 = vadd.f32 0.0, %v413
    %v415 = vpop.f32.mrf.mxu0
    %416 = vdwg.mxu0
    %p417 = scmp.eq.s32.totalorder 0, 0
    // Predicated region
    $region14: #{tpu_custom_call.1} parent=1 // pred_check
      %p418 = pneg %p417
    $region15: #{tpu_custom_call.1} parent=1 // pred_check_branch
      %420 = sbr.rel (%p418) target = $region17
    $region16: #{tpu_custom_call.1} parent=1 // pred_region
      %vm421 = vcmask 7168
      %422 = vst.msk [vmem:[#allocation2] sm:$0xff] %vm421, %v245
      %423 = vst.msk [vmem:[#allocation2 + $0x8] sm:$0xff] %vm421, %v247
      %424 = vst.msk [vmem:[#allocation2 + $0x10] sm:$0xff] %vm421, %v249
      %425 = vst.msk [vmem:[#allocation2 + $0x18] sm:$0xff] %vm421, %v251
      %426 = vst.msk [vmem:[#allocation2 + $0x20] sm:$0xff] %vm421, %v253
      %427 = vst.msk [vmem:[#allocation2 + $0x28] sm:$0xff] %vm421, %v255
      %428 = vst.msk [vmem:[#allocation2 + $0x30] sm:$0xff] %vm421, %v257
      %429 = vst.msk [vmem:[#allocation2 + $0x38] sm:$0xff] %vm421, %v259
      %430 = vst.msk [vmem:[#allocation3] sm:$0xff] %vm421, %v278
      %431 = vst.msk [vmem:[#allocation3 + $0x8] sm:$0xff] %vm421, %v279
      %432 = vst.msk [vmem:[#allocation3 + $0x10] sm:$0xff] %vm421, %v280
      %433 = vst.msk [vmem:[#allocation3 + $0x18] sm:$0xff] %vm421, %v281
      %434 = vst.msk [vmem:[#allocation3 + $0x20] sm:$0xff] %vm421, %v282
      %435 = vst.msk [vmem:[#allocation3 + $0x28] sm:$0xff] %vm421, %v283
      %436 = vst.msk [vmem:[#allocation3 + $0x30] sm:$0xff] %vm421, %v284
      %437 = vst.msk [vmem:[#allocation3 + $0x38] sm:$0xff] %vm421, %v285
      %438 = vst.msk [vmem:[#allocation4] sm:$0xff] %vm44, %v379
      %439 = vst.msk [vmem:[#allocation4 + $0x8] sm:$0xff] %vm44, %v384
      %440 = vst.msk [vmem:[#allocation4 + $0x10] sm:$0xff] %vm44, %v389
      %441 = vst.msk [vmem:[#allocation4 + $0x18] sm:$0xff] %vm44, %v394
      %442 = vst.msk [vmem:[#allocation4 + $0x20] sm:$0xff] %vm44, %v399
      %443 = vst.msk [vmem:[#allocation4 + $0x28] sm:$0xff] %vm44, %v404
      %444 = vst.msk [vmem:[#allocation4 + $0x30] sm:$0xff] %vm44, %v409
      %445 = vst.msk [vmem:[#allocation4 + $0x38] sm:$0xff] %vm44, %v414
    $region17: #{tpu_custom_call.1} parent=1 // pred_fallthru
      _
    %p446 = scmp.gt.s32.totalorder 0, 0
    // Predicated region
    $region18: #{tpu_custom_call.1} parent=1 // pred_check
      %p447 = pneg %p446
    $region19: #{tpu_custom_call.1} parent=1 // pred_check_branch
      %449 = sbr.rel (%p447) target = $region21
    $region20: #{tpu_custom_call.1} parent=1 // pred_region
      %v450 = vld [vmem:[#allocation2] sm:$0xff]
      %v451 = vld [vmem:[#allocation2 + $0x8] sm:$0xff]
      %v452 = vld [vmem:[#allocation2 + $0x10] sm:$0xff]
      %v453 = vld [vmem:[#allocation2 + $0x18] sm:$0xff]
      %v454 = vld [vmem:[#allocation2 + $0x20] sm:$0xff]
      %v455 = vld [vmem:[#allocation2 + $0x28] sm:$0xff]
      %v456 = vld [vmem:[#allocation2 + $0x30] sm:$0xff]
      %v457 = vld [vmem:[#allocation2 + $0x38] sm:$0xff]
      %vm458 = vcmp.lt.f32.partialorder %v245, %v450
      %vm459 = vcmp.lt.f32.partialorder %v247, %v451
      %vm460 = vcmp.lt.f32.partialorder %v249, %v452
      %vm461 = vcmp.lt.f32.partialorder %v251, %v453
      %vm462 = vcmp.lt.f32.partialorder %v253, %v454
      %vm463 = vcmp.lt.f32.partialorder %v255, %v455
      %vm464 = vcmp.lt.f32.partialorder %v257, %v456
      %vm465 = vcmp.lt.f32.partialorder %v259, %v457
      %v466 = vsel %vm458, %v245, %v450
      %v467 = vsel %vm459, %v247, %v451
      %v468 = vsel %vm460, %v249, %v452
      %v469 = vsel %vm461, %v251, %v453
      %v470 = vsel %vm462, %v253, %v454
      %v471 = vsel %vm463, %v255, %v455
      %v472 = vsel %vm464, %v257, %v456
      %v473 = vsel %vm465, %v259, %v457
      %vm474 = vcmask 7168
      %475 = vst.msk [vmem:[#allocation2] sm:$0xff] %vm474, %v466
      %476 = vst.msk [vmem:[#allocation2 + $0x8] sm:$0xff] %vm474, %v467
      %477 = vst.msk [vmem:[#allocation2 + $0x10] sm:$0xff] %vm474, %v468
      %478 = vst.msk [vmem:[#allocation2 + $0x18] sm:$0xff] %vm474, %v469
      %479 = vst.msk [vmem:[#allocation2 + $0x20] sm:$0xff] %vm474, %v470
      %480 = vst.msk [vmem:[#allocation2 + $0x28] sm:$0xff] %vm474, %v471
      %481 = vst.msk [vmem:[#allocation2 + $0x30] sm:$0xff] %vm474, %v472
      %482 = vst.msk [vmem:[#allocation2 + $0x38] sm:$0xff] %vm474, %v473
      %v483 = vld [vmem:[#allocation3] sm:$0xff]
      %v484 = vld [vmem:[#allocation3 + $0x8] sm:$0xff]
      %v485 = vld [vmem:[#allocation3 + $0x10] sm:$0xff]
      %v486 = vld [vmem:[#allocation3 + $0x18] sm:$0xff]
      %v487 = vld [vmem:[#allocation3 + $0x20] sm:$0xff]
      %v488 = vld [vmem:[#allocation3 + $0x28] sm:$0xff]
      %v489 = vld [vmem:[#allocation3 + $0x30] sm:$0xff]
      %v490 = vld [vmem:[#allocation3 + $0x38] sm:$0xff]
      %v491 = vsel %vm458, %v278, %v483
      %v492 = vsel %vm459, %v279, %v484
      %v493 = vsel %vm460, %v280, %v485
      %v494 = vsel %vm461, %v281, %v486
      %v495 = vsel %vm462, %v282, %v487
      %v496 = vsel %vm463, %v283, %v488
      %v497 = vsel %vm464, %v284, %v489
      %v498 = vsel %vm465, %v285, %v490
      %499 = vst.msk [vmem:[#allocation3] sm:$0xff] %vm474, %v491
      %500 = vst.msk [vmem:[#allocation3 + $0x8] sm:$0xff] %vm474, %v492
      %501 = vst.msk [vmem:[#allocation3 + $0x10] sm:$0xff] %vm474, %v493
      %502 = vst.msk [vmem:[#allocation3 + $0x18] sm:$0xff] %vm474, %v494
      %503 = vst.msk [vmem:[#allocation3 + $0x20] sm:$0xff] %vm474, %v495
      %504 = vst.msk [vmem:[#allocation3 + $0x28] sm:$0xff] %vm474, %v496
      %505 = vst.msk [vmem:[#allocation3 + $0x30] sm:$0xff] %vm474, %v497
      %506 = vst.msk [vmem:[#allocation3 + $0x38] sm:$0xff] %vm474, %v498
      %v507 = vld [vmem:[#allocation4] sm:$0xff]
      %v508 = vld [vmem:[#allocation4 + $0x8] sm:$0xff]
      %v509 = vld [vmem:[#allocation4 + $0x10] sm:$0xff]
      %v510 = vld [vmem:[#allocation4 + $0x18] sm:$0xff]
      %v511 = vld [vmem:[#allocation4 + $0x20] sm:$0xff]
      %v512 = vld [vmem:[#allocation4 + $0x28] sm:$0xff]
      %v513 = vld [vmem:[#allocation4 + $0x30] sm:$0xff]
      %v514 = vld [vmem:[#allocation4 + $0x38] sm:$0xff]
      %v515 = vsel %vm458, 1, 0
      %v516 = vsel %vm459, 1, 0
      %v517 = vsel %vm460, 1, 0
      %v518 = vsel %vm461, 1, 0
      %v519 = vsel %vm462, 1, 0
      %v520 = vsel %vm463, 1, 0
      %v521 = vsel %vm464, 1, 0
      %v522 = vsel %vm465, 1, 0
      %523 = vset.pattern.permute.xlu0 0
      %524 = vperm.xlu0 %523, %v515
      %v525 = vpop.permute.xlu0 %524
      %526 = vset.pattern.permute.xlu0 0
      %527 = vperm.xlu0 %526, %v516
      %v528 = vpop.permute.xlu0 %527
      %529 = vset.pattern.permute.xlu0 0
      %530 = vperm.xlu0 %529, %v517
      %v531 = vpop.permute.xlu0 %530
      %532 = vset.pattern.permute.xlu0 0
      %533 = vperm.xlu0 %532, %v518
      %v534 = vpop.permute.xlu0 %533
      %535 = vset.pattern.permute.xlu0 0
      %536 = vperm.xlu0 %535, %v519
      %v537 = vpop.permute.xlu0 %536
      %538 = vset.pattern.permute.xlu0 0
      %539 = vperm.xlu0 %538, %v520
      %v540 = vpop.permute.xlu0 %539
      %541 = vset.pattern.permute.xlu0 0
      %542 = vperm.xlu0 %541, %v521
      %v543 = vpop.permute.xlu0 %542
      %544 = vset.pattern.permute.xlu0 0
      %545 = vperm.xlu0 %544, %v522
      %v546 = vpop.permute.xlu0 %545
      %vm547 = vcmp.eq.s32.totalorder %v525, 1
      %vm548 = vcmp.eq.s32.totalorder %v528, 1
      %vm549 = vcmp.eq.s32.totalorder %v531, 1
      %vm550 = vcmp.eq.s32.totalorder %v534, 1
      %vm551 = vcmp.eq.s32.totalorder %v537, 1
      %vm552 = vcmp.eq.s32.totalorder %v540, 1
      %vm553 = vcmp.eq.s32.totalorder %v543, 1
      %vm554 = vcmp.eq.s32.totalorder %v546, 1
      %v555 = vsel %vm547, %v379, %v507
      %v556 = vsel %vm548, %v384, %v508
      %v557 = vsel %vm549, %v389, %v509
      %v558 = vsel %vm550, %v394, %v510
      %v559 = vsel %vm551, %v399, %v511
      %v560 = vsel %vm552, %v404, %v512
      %v561 = vsel %vm553, %v409, %v513
      %v562 = vsel %vm554, %v414, %v514
      %563 = vst.msk [vmem:[#allocation4] sm:$0xff] %vm44, %v555
      %564 = vst.msk [vmem:[#allocation4 + $0x8] sm:$0xff] %vm44, %v556
      %565 = vst.msk [vmem:[#allocation4 + $0x10] sm:$0xff] %vm44, %v557
      %566 = vst.msk [vmem:[#allocation4 + $0x18] sm:$0xff] %vm44, %v558
      %567 = vst.msk [vmem:[#allocation4 + $0x20] sm:$0xff] %vm44, %v559
      %568 = vst.msk [vmem:[#allocation4 + $0x28] sm:$0xff] %vm44, %v560
      %569 = vst.msk [vmem:[#allocation4 + $0x30] sm:$0xff] %vm44, %v561
      %570 = vst.msk [vmem:[#allocation4 + $0x38] sm:$0xff] %vm44, %v562
    $region21: #{tpu_custom_call.1} parent=1 // pred_fallthru
      _
    // Predicated region
    $region22: #{tpu_custom_call.1} parent=1 // pred_check
      %p571 = pneg %p417
    $region23: #{tpu_custom_call.1} parent=1 // pred_check_branch
      %573 = sbr.rel (%p571) target = $region25
    $region24: #{tpu_custom_call.1} parent=1 // pred_region
      %v574 = vld [vmem:[#allocation4] sm:$0xff]
      %v575 = vld [vmem:[#allocation4 + $0x8] sm:$0xff]
      %v576 = vld [vmem:[#allocation4 + $0x10] sm:$0xff]
      %v577 = vld [vmem:[#allocation4 + $0x18] sm:$0xff]
      %v578 = vld [vmem:[#allocation4 + $0x20] sm:$0xff]
      %v579 = vld [vmem:[#allocation4 + $0x28] sm:$0xff]
      %v580 = vld [vmem:[#allocation4 + $0x30] sm:$0xff]
      %v581 = vld [vmem:[#allocation4 + $0x38] sm:$0xff]
      %v582 = vsub.f32 %v574, %v19
      %v583 = vsub.f32 %v575, %v20
      %v584 = vsub.f32 %v576, %v21
      %v585 = vsub.f32 %v577, %v22
      %v586 = vsub.f32 %v578, %v23
      %v587 = vsub.f32 %v579, %v24
      %v588 = vsub.f32 %v580, %v25
      %v589 = vsub.f32 %v581, %v26
      %v590 = vmul.f32 %v582, %v582
      %v591 = vmul.f32 %v583, %v583
      %v592 = vmul.f32 %v584, %v584
      %v593 = vmul.f32 %v585, %v585
      %v594 = vmul.f32 %v586, %v586
      %v595 = vmul.f32 %v587, %v587
      %v596 = vmul.f32 %v588, %v588
      %v597 = vmul.f32 %v589, %v589
      %v598 = vsel %vm44, %v590, 0.0
      %599 = vadd.xlane.f32.xlu0 %v598
      %v600 = vpop.xlane.xlu0 %599
      %v601 = vsel %vm44, %v591, 0.0
      %602 = vadd.xlane.f32.xlu0 %v601
      %v603 = vpop.xlane.xlu0 %602
      %v604 = vsel %vm44, %v592, 0.0
      %605 = vadd.xlane.f32.xlu0 %v604
      %v606 = vpop.xlane.xlu0 %605
      %v607 = vsel %vm44, %v593, 0.0
      %608 = vadd.xlane.f32.xlu0 %v607
      %v609 = vpop.xlane.xlu0 %608
      %v610 = vsel %vm44, %v594, 0.0
      %611 = vadd.xlane.f32.xlu0 %v610
      %v612 = vpop.xlane.xlu0 %611
      %v613 = vsel %vm44, %v595, 0.0
      %614 = vadd.xlane.f32.xlu0 %v613
      %v615 = vpop.xlane.xlu0 %614
      %v616 = vsel %vm44, %v596, 0.0
      %617 = vadd.xlane.f32.xlu0 %v616
      %v618 = vpop.xlane.xlu0 %617
      %v619 = vsel %vm44, %v597, 0.0
      %620 = vadd.xlane.f32.xlu0 %v619
      %v621 = vpop.xlane.xlu0 %620
      %v622 = vrcp.pop 32.0
      %v623 = vmul.f32 %v600, %v622
      %v624 = vmul.f32 %v603, %v622
      %v625 = vmul.f32 %v606, %v622
      %v626 = vmul.f32 %v609, %v622
      %v627 = vmul.f32 %v612, %v622
      %v628 = vmul.f32 %v615, %v622
      %v629 = vmul.f32 %v618, %v622
      %v630 = vmul.f32 %v621, %v622
      %v631 = vmul.f32 %v623, 1.25
      %v632 = vmul.f32 %v624, 1.25
      %v633 = vmul.f32 %v625, 1.25
      %v634 = vmul.f32 %v626, 1.25
      %v635 = vmul.f32 %v627, 1.25
      %v636 = vmul.f32 %v628, 1.25
      %v637 = vmul.f32 %v629, 1.25
      %v638 = vmul.f32 %v630, 1.25
      %639 = vst.msk [vmem:[%s3] sm:$0xff] %vm44, %v574
      %640 = vst.msk [vmem:[%s3 + $0x8] sm:$0xff] %vm44, %v575
      %641 = vst.msk [vmem:[%s3 + $0x10] sm:$0xff] %vm44, %v576
      %642 = vst.msk [vmem:[%s3 + $0x18] sm:$0xff] %vm44, %v577
      %643 = vst.msk [vmem:[%s3 + $0x20] sm:$0xff] %vm44, %v578
      %644 = vst.msk [vmem:[%s3 + $0x28] sm:$0xff] %vm44, %v579
      %645 = vst.msk [vmem:[%s3 + $0x30] sm:$0xff] %vm44, %v580
      %646 = vst.msk [vmem:[%s3 + $0x38] sm:$0xff] %vm44, %v581
      %v655 = vlaneseq
      %v656 = vshrl.u32 %v655, 7
      %v657 = vsub.s32 %v287, %v656
      %v658 = vrot.slane %v631, %v657
      %v659 = vadd.s32 %v287, 4294967288
      %v660 = vlaneseq
      %v661 = vshrl.u32 %v660, 7
      %v662 = vsub.s32 %v659, %v661
      %v663 = vrot.slane %v632, %v662
      %vm664 = vcmask 130112
      %v665 = vsel %vm664, %v663, %v658
      %v666 = vadd.s32 %v287, 4294967280
      %v667 = vlaneseq
      %v668 = vshrl.u32 %v667, 7
      %v669 = vsub.s32 %v666, %v668
      %v670 = vrot.slane %v633, %v669
      %vm671 = vcmask 195712
      %v672 = vsel %vm671, %v670, %v665
      %v673 = vadd.s32 %v287, 4294967272
      %v674 = vlaneseq
      %v675 = vshrl.u32 %v674, 7
      %v676 = vsub.s32 %v673, %v675
      %v677 = vrot.slane %v634, %v676
      %vm678 = vcmask 261312
      %v679 = vsel %vm678, %v677, %v672
      %v680 = vadd.s32 %v287, 4294967264
      %v681 = vlaneseq
      %v682 = vshrl.u32 %v681, 7
      %v683 = vsub.s32 %v680, %v682
      %v684 = vrot.slane %v635, %v683
      %vm685 = vcmask 326912
      %v686 = vsel %vm685, %v684, %v679
      %v687 = vadd.s32 %v287, 4294967256
      %v688 = vlaneseq
      %v689 = vshrl.u32 %v688, 7
      %v690 = vsub.s32 %v687, %v689
      %v691 = vrot.slane %v636, %v690
      %vm692 = vcmask 392512
      %v693 = vsel %vm692, %v691, %v686
      %v694 = vadd.s32 %v287, 4294967248
      %v695 = vlaneseq
      %v696 = vshrl.u32 %v695, 7
      %v697 = vsub.s32 %v694, %v696
      %v698 = vrot.slane %v637, %v697
      %vm699 = vcmask 458112
      %v700 = vsel %vm699, %v698, %v693
      %v701 = vadd.s32 %v287, 4294967240
      %v702 = vlaneseq
      %v703 = vshrl.u32 %v702, 7
      %v704 = vsub.s32 %v701, %v703
      %v705 = vrot.slane %v638, %v704
      %vm706 = vcmask 523712
      %v707 = vsel %vm706, %v705, %v700
      %vm709 = vcmask 516096
      %710 = vst.msk [vmem:[#allocation5] sm:$0x1] %vm709, %v707
      %v711 = vld [vmem:[#allocation3] sm:$0xff]
      %v712 = vld [vmem:[#allocation3 + $0x8] sm:$0xff]
      %v713 = vld [vmem:[#allocation3 + $0x10] sm:$0xff]
      %v714 = vld [vmem:[#allocation3 + $0x18] sm:$0xff]
      %v715 = vld [vmem:[#allocation3 + $0x20] sm:$0xff]
      %v716 = vld [vmem:[#allocation3 + $0x28] sm:$0xff]
      %v717 = vld [vmem:[#allocation3 + $0x30] sm:$0xff]
      %v718 = vld [vmem:[#allocation3 + $0x38] sm:$0xff]
      %719 = vset.pattern.permute.xlu0 0
      %720 = vperm.xlu0 %719, %v711
      %v721 = vpop.permute.xlu0 %720
      %722 = vset.pattern.permute.xlu0 0
      %723 = vperm.xlu0 %722, %v712
      %v724 = vpop.permute.xlu0 %723
      %725 = vset.pattern.permute.xlu0 0
      %726 = vperm.xlu0 %725, %v713
      %v727 = vpop.permute.xlu0 %726
      %728 = vset.pattern.permute.xlu0 0
      %729 = vperm.xlu0 %728, %v714
      %v730 = vpop.permute.xlu0 %729
      %731 = vset.pattern.permute.xlu0 0
      %732 = vperm.xlu0 %731, %v715
      %v733 = vpop.permute.xlu0 %732
      %734 = vset.pattern.permute.xlu0 0
      %735 = vperm.xlu0 %734, %v716
      %v736 = vpop.permute.xlu0 %735
      %737 = vset.pattern.permute.xlu0 0
      %738 = vperm.xlu0 %737, %v717
      %v739 = vpop.permute.xlu0 %738
      %740 = vset.pattern.permute.xlu0 0
      %741 = vperm.xlu0 %740, %v718
      %v742 = vpop.permute.xlu0 %741
      %v743 = vlaneseq
      %v744 = vshrl.u32 %v743, 7
      %v745 = vsub.s32 %v287, %v744
      %v746 = vrot.slane %v721, %v745
      %v747 = vlaneseq
      %v748 = vshrl.u32 %v747, 7
      %v749 = vsub.s32 %v659, %v748
      %v750 = vrot.slane %v724, %v749
      %v751 = vsel %vm664, %v750, %v746
      %v752 = vlaneseq
      %v753 = vshrl.u32 %v752, 7
      %v754 = vsub.s32 %v666, %v753
      %v755 = vrot.slane %v727, %v754
      %v756 = vsel %vm671, %v755, %v751
      %v757 = vlaneseq
      %v758 = vshrl.u32 %v757, 7
      %v759 = vsub.s32 %v673, %v758
      %v760 = vrot.slane %v730, %v759
      %v761 = vsel %vm678, %v760, %v756
      %v762 = vlaneseq
      %v763 = vshrl.u32 %v762, 7
      %v764 = vsub.s32 %v680, %v763
      %v765 = vrot.slane %v733, %v764
      %v766 = vsel %vm685, %v765, %v761
      %v767 = vlaneseq
      %v768 = vshrl.u32 %v767, 7
      %v769 = vsub.s32 %v687, %v768
      %v770 = vrot.slane %v736, %v769
      %v771 = vsel %vm692, %v770, %v766
      %v772 = vlaneseq
      %v773 = vshrl.u32 %v772, 7
      %v774 = vsub.s32 %v694, %v773
      %v775 = vrot.slane %v739, %v774
      %v776 = vsel %vm699, %v775, %v771
      %v777 = vlaneseq
      %v778 = vshrl.u32 %v777, 7
      %v779 = vsub.s32 %v701, %v778
      %v780 = vrot.slane %v742, %v779
      %v781 = vsel %vm706, %v780, %v776
      %782 = vst.msk [vmem:[#allocation7] sm:$0x1] %vm709, %v781
    $region25: #{tpu_custom_call.1} parent=1 // pred_fallthru
      _
    // Predicated region
    $region26: #{tpu_custom_call.1} parent=1 // pred_check
      _
    $region27: #{tpu_custom_call.1} parent=1 // pred_check_branch
      %784 = sbr.rel (0) target = $region29
    $region28: #{tpu_custom_call.1} parent=1 // pred_region
      _
    $region29: #{tpu_custom_call.1} parent=1 // pred_fallthru
      _
    // Predicated region
    $region30: #{tpu_custom_call.1} parent=1 // pred_check
      _
    $region31: #{tpu_custom_call.1} parent=1 // pred_check_branch
      %786 = sbr.rel (0) target = $region33
    $region32: #{tpu_custom_call.1} parent=1 // pred_region
      %s788 = ssub.s32 16, 16
      %789 = vsyncadd [#allocation6], %s788
      %s791 = sshll.u32 [#allocation5], 4
      %s792 = int_to_ptr.vmem [resolvable:$true] %s791
      %794 = dma.vmem_to_hbm [thread:$0]  %s792, 16, %s4, [#allocation6]
    $region33: #{tpu_custom_call.1} parent=1 // pred_fallthru
      _
    // Predicated region
    $region34: #{tpu_custom_call.1} parent=1 // pred_check
      _
    $region35: #{tpu_custom_call.1} parent=1 // pred_check_branch
      %796 = sbr.rel (0) target = $region37
    $region36: #{tpu_custom_call.1} parent=1 // pred_region
      %s798 = ssub.s32 16, 16
      %799 = vsyncadd [#allocation8], %s798
      %s801 = sshll.u32 [#allocation7], 4
      %s802 = int_to_ptr.vmem [resolvable:$true] %s801
      %804 = dma.vmem_to_hbm [thread:$0]  %s802, 16, %s5, [#allocation8]
    $region37: #{tpu_custom_call.1} parent=1 // pred_fallthru
      _
    // Predicated region
    $region38: #{tpu_custom_call.1} parent=1 // pred_check
      _
    $region39: #{tpu_custom_call.1} parent=1 // pred_check_branch
      %806 = sbr.rel (0) target = $region41
    $region40: #{tpu_custom_call.1} parent=1 // pred_region
      _
    $region41: #{tpu_custom_call.1} parent=1 // pred_fallthru
      _
    // Predicated region
    $region42: #{tpu_custom_call.1} parent=1 // pred_check
      _
    $region43: #{tpu_custom_call.1} parent=1 // pred_check_branch
      %808 = sbr.rel (0) target = $region45
    $region44: #{tpu_custom_call.1} parent=1 // pred_region
      %809 = dma.done [#allocation6], 16
    $region45: #{tpu_custom_call.1} parent=1 // pred_fallthru
      _
    // Predicated region
    $region46: #{tpu_custom_call.1} parent=1 // pred_check
      _
    $region47: #{tpu_custom_call.1} parent=1 // pred_check_branch
      %811 = sbr.rel (0) target = $region49
    $region48: #{tpu_custom_call.1} parent=1 // pred_region
      %812 = dma.done [#allocation8], 16
    $region49: #{tpu_custom_call.1} parent=1 // pred_fallthru
      _
    %813 = vsyncpa [#allocation6], 1
    %814 = vsyncpa [#allocation8], 1

</llo_original>
